<compile_context>
chip_gen: v7x
topology: tpu7x:2x2x1
jax: 0.10.0
libtpu: 0.0.40
codegen_flags: <defaults>
</compile_context>

<pallas_src>
import functools

import jax
import jax.numpy as jnp
from jax.experimental import pallas as pl
from jax.experimental.pallas import tpu as pltpu


def _disblock_kernel(x_ref, w1_ref, b1_ref, w2_ref, b2_ref, row_ref, col_ref,
                     *rest, H, W, downsample, learnable_sc, mxu_dtype):
    """One image per grid step. All operands fit in VMEM; no scratch buffers."""
    rest = list(rest)
    o_ref = rest.pop()                      # output ref is last (no scratch)
    if learnable_sc:
        wsc_ref, bsc_ref = rest[0], rest[1]
        rest = rest[2:]
    if downsample:
        pool_ref = rest[0]

    x = x_ref[...].astype(jnp.float32)      # (Cin, H*W), lane-dense
    row = row_ref[...]                      # (1, H*W) int32 y-coordinate
    col = col_ref[...]                      # (1, H*W) int32 x-coordinate

    def shifted(h, dy, dx):
        """h spatially shifted by (dy, dx); zero outside the image. (C, H*W)."""
        s = dy * W + dx
        # Static lane shift (lowers to lane slices + concat); wrapped lanes are
        # exactly the out-of-image positions and get masked below.
        t = h if s == 0 else jnp.roll(h, -s, axis=1)
        keep = None
        if dy == -1:
            keep = row >= 1
        elif dy == 1:
            keep = row <= H - 2
        if dx == -1:
            k = col >= 1
            keep = k if keep is None else jnp.logical_and(keep, k)
        elif dx == 1:
            k = col <= W - 2
            keep = k if keep is None else jnp.logical_and(keep, k)
        return t if keep is None else jnp.where(keep, t, 0.0)

    def conv3x3(h, w_ref, b_ref):
        """3x3 'same' conv as a single lane-dense im2col matmul on the MXU."""
        patches = jnp.concatenate(
            [shifted(h, dy, dx) for dy in (-1, 0, 1) for dx in (-1, 0, 1)],
            axis=0)                                        # (9*C, H*W)
        return (jnp.dot(w_ref[...], patches.astype(mxu_dtype),
                        preferred_element_type=jnp.float32)
                + b_ref[...])                              # (Cout_, H*W) f32

    # ---------------- residual branch: relu -> c1 -> relu -> c2 ------------
    h = conv3x3(jnp.maximum(x, 0.0), w1_ref, b1_ref)       # (Chid, H*W)
    h = conv3x3(jnp.maximum(h, 0.0), w2_ref, b2_ref)       # (Cout, H*W)

    # --------------------------- shortcut branch ---------------------------
    if learnable_sc:
        sc = (jnp.dot(wsc_ref[...], x.astype(mxu_dtype),
                      preferred_element_type=jnp.float32) + bsc_ref[...])
    else:
        sc = x                                             # Cin == Cout

    total = h + sc                                         # (Cout, H*W) f32

    if downsample:
        # 2x2 avg pool as one matmul with a constant (H*W, Ho*Wo) matrix:
        # no VMEM round trip, no strided loads.
        total = jnp.dot(total, pool_ref[...],
                        preferred_element_type=jnp.float32)

    o_ref[...] = total.astype(o_ref.dtype)


def _avg_pool_matrix(H, W):
    """P[(y*W+x), (y'*Wo+x')] = 0.25 iff y//2==y' and x//2==x'."""
    Ho, Wo = H // 2, W // 2
    p = jnp.arange(H * W)
    q = jnp.arange(Ho * Wo)
    same_y = (p[:, None] // W) // 2 == q[None, :] // Wo
    same_x = (p[:, None] % W) // 2 == q[None, :] % Wo
    return jnp.where(same_y & same_x, 0.25, 0.0).astype(jnp.float32)


def disblock_forward(x_nchw, params, *, downsample=True, learnable_sc=None,
                     mxu_dtype=jnp.bfloat16):
    """x_nchw: (B, Cin, H, W) float32 (PyTorch layout). Returns (B, Cout, Ho, Wo)."""
    w1, b1, w2, b2, wsc, bsc = params      # w1/w2: HWIO (3,3,Ci,Co); wsc: (Cin,Cout)
    B, Cin, H, W = x_nchw.shape
    Chid, Cout = w1.shape[3], w2.shape[3]
    if learnable_sc is None:
        learnable_sc = (Cin != Cout) or downsample
    if not learnable_sc:
        assert Cin == Cout, "identity shortcut requires Cin == Cout"
    if downsample:
        assert H % 2 == 0 and W % 2 == 0
    HW = H * W
    Ho, Wo = (H // 2, W // 2) if downsample else (H, W)
    out_hw = Ho * Wo

    # Lane-dense operands: activations (B, Cin, H*W); conv weights reshaped to
    # (Cout, 9*Cin) matching the tap-major im2col row order; bf16 MXU operands.
    x_flat = x_nchw.reshape(B, Cin, HW).astype(jnp.float32)
    w1m = jnp.transpose(w1, (3, 0, 1, 2)).reshape(Chid, 9 * Cin).astype(mxu_dtype)
    w2m = jnp.transpose(w2, (3, 0, 1, 2)).reshape(Cout, 9 * Chid).astype(mxu_dtype)
    b1c = b1.reshape(Chid, 1).astype(jnp.float32)
    b2c = b2.reshape(Cout, 1).astype(jnp.float32)

    # Per-lane (y, x) coordinates for the conv border masks (built host-side so
    # the kernel needs no in-kernel integer div/mod).
    ys, xs = jnp.meshgrid(jnp.arange(H, dtype=jnp.int32),
                          jnp.arange(W, dtype=jnp.int32), indexing="ij")
    row_idx = ys.reshape(1, HW)
    col_idx = xs.reshape(1, HW)

    inputs = [x_flat, w1m, b1c, w2m, b2c, row_idx, col_idx]
    in_specs = [
        pl.BlockSpec((None, Cin, HW), lambda b: (b, 0, 0)),   # one image / step
        pl.BlockSpec((Chid, 9 * Cin), lambda b: (0, 0)),
        pl.BlockSpec((Chid, 1), lambda b: (0, 0)),
        pl.BlockSpec((Cout, 9 * Chid), lambda b: (0, 0)),
        pl.BlockSpec((Cout, 1), lambda b: (0, 0)),
        pl.BlockSpec((1, HW), lambda b: (0, 0)),
        pl.BlockSpec((1, HW), lambda b: (0, 0)),
    ]
    if learnable_sc:
        inputs += [jnp.transpose(wsc).astype(mxu_dtype),      # (Cout, Cin)
                   bsc.reshape(Cout, 1).astype(jnp.float32)]
        in_specs += [pl.BlockSpec((Cout, Cin), lambda b: (0, 0)),
                     pl.BlockSpec((Cout, 1), lambda b: (0, 0))]
    if downsample:
        inputs += [_avg_pool_matrix(H, W)]                    # (HW, Ho*Wo) f32
        in_specs += [pl.BlockSpec((HW, out_hw), lambda b: (0, 0))]

    kernel = functools.partial(_disblock_kernel, H=H, W=W,
                               downsample=downsample,
                               learnable_sc=learnable_sc,
                               mxu_dtype=mxu_dtype)

    out = pl.pallas_call(
        kernel,
        out_shape=jax.ShapeDtypeStruct((B, Cout, out_hw), jnp.float32),
        grid_spec=pltpu.PrefetchScalarGridSpec(
            num_scalar_prefetch=0,
            grid=(B,),
            in_specs=in_specs,
            out_specs=pl.BlockSpec((None, Cout, out_hw), lambda b: (b, 0, 0)),
        ),
        compiler_params=pltpu.CompilerParams(
            dimension_semantics=("parallel",)),
    )(*inputs)

    return out.reshape(B, Cout, Ho, Wo)


# ------------- pure-JAX reference (for correctness check only) -------------
def _conv_nhwc(x, w, b, pad):
    y = jax.lax.conv_general_dilated(
        x, w, window_strides=(1, 1), padding=[(pad, pad), (pad, pad)],
        dimension_numbers=("NHWC", "HWIO", "NHWC"))
    return y + b


def _avg_pool2(x):
    B, H, W, C = x.shape
    return x.reshape(B, H // 2, 2, W // 2, 2, C).mean(axis=(2, 4))


if __name__ == "__main__":
    B, Cin, H, W = 2, 4, 16, 16
    Chid, Cout = 4, 8          # in_channels != out_channels -> learnable_sc
    downsample = True

    key = jax.random.PRNGKey(0)
    ks = jax.random.split(key, 7)
    x_nchw = jax.random.normal(ks[0], (B, Cin, H, W), jnp.float32)  # PyTorch NCHW
    w1 = 0.1 * jax.random.normal(ks[1], (3, 3, Cin, Chid), jnp.float32)
    b1 = 0.05 * jax.random.normal(ks[2], (Chid,), jnp.float32)
    w2 = 0.1 * jax.random.normal(ks[3], (3, 3, Chid, Cout), jnp.float32)
    b2 = 0.05 * jax.random.normal(ks[4], (Cout,), jnp.float32)
    wsc = 0.1 * jax.random.normal(ks[5], (Cin, Cout), jnp.float32)
    bsc = 0.05 * jax.random.normal(ks[6], (Cout,), jnp.float32)

    out_nchw = disblock_forward(x_nchw, (w1, b1, w2, b2, wsc, bsc),
                                downsample=downsample)
    out_nchw = jax.block_until_ready(out_nchw)

    # reference forward (pure f32)
    x_nhwc = jnp.transpose(x_nchw, (0, 2, 3, 1))
    h = jnp.maximum(x_nhwc, 0.0)
    h = _conv_nhwc(h, w1, b1, 1)
    h = jnp.maximum(h, 0.0)
    h = _conv_nhwc(h, w2, b2, 1)
    h = _avg_pool2(h)
    sc = _conv_nhwc(x_nhwc, wsc.reshape(1, 1, Cin, Cout), bsc, 0)
    sc = _avg_pool2(sc)
    ref_nchw = jnp.transpose(h + sc, (0, 3, 1, 2))

    assert out_nchw.shape == (B, Cout, H // 2, W // 2)
    err = float(jnp.max(jnp.abs(out_nchw - ref_nchw)))
    # bf16 MXU operands with f32 accumulation vs an f32 reference -> loosened
    # tolerance compared to the old all-f32 kernel.
    assert err < 5e-2, f"max abs err {err}"
    print("KERNEL_OK")
</pallas_src>

<mosaic_0001>
module attributes {stable_mosaic.version = 11 : i64} {
  func.func @_disblock_kernel(%arg0: i32, %arg1: memref<1x4x256xf32, #tpu.memory_space<vmem>>, %arg2: memref<4x36xbf16, #tpu.memory_space<vmem>>, %arg3: memref<4x1xf32, #tpu.memory_space<vmem>>, %arg4: memref<8x36xbf16, #tpu.memory_space<vmem>>, %arg5: memref<8x1xf32, #tpu.memory_space<vmem>>, %arg6: memref<1x256xi32, #tpu.memory_space<vmem>>, %arg7: memref<1x256xi32, #tpu.memory_space<vmem>>, %arg8: memref<8x4xbf16, #tpu.memory_space<vmem>>, %arg9: memref<8x1xf32, #tpu.memory_space<vmem>>, %arg10: memref<256x64xf32, #tpu.memory_space<vmem>>, %arg11: memref<1x8x64xf32, #tpu.memory_space<vmem>>) attributes {dimension_semantics = [#tpu.dimension_semantics<parallel>], iteration_bounds = array<i64: 2>, scalar_prefetch = 0 : i64, scratch_operands = 0 : i64, tpu.core_type = #tpu.core_type<tc>, window_params = [{transform_indices = @transform_0, window_bounds = array<i64: 1, 4, 256>}, {pipeline_mode = #tpu.pipeline_mode<synchronous>, transform_indices = @transform_1, window_bounds = array<i64: 4, 36>}, {pipeline_mode = #tpu.pipeline_mode<synchronous>, transform_indices = @transform_2, window_bounds = array<i64: 4, 1>}, {pipeline_mode = #tpu.pipeline_mode<synchronous>, transform_indices = @transform_3, window_bounds = array<i64: 8, 36>}, {pipeline_mode = #tpu.pipeline_mode<synchronous>, transform_indices = @transform_4, window_bounds = array<i64: 8, 1>}, {pipeline_mode = #tpu.pipeline_mode<synchronous>, transform_indices = @transform_5, window_bounds = array<i64: 1, 256>}, {pipeline_mode = #tpu.pipeline_mode<synchronous>, transform_indices = @transform_6, window_bounds = array<i64: 1, 256>}, {pipeline_mode = #tpu.pipeline_mode<synchronous>, transform_indices = @transform_7, window_bounds = array<i64: 8, 4>}, {pipeline_mode = #tpu.pipeline_mode<synchronous>, transform_indices = @transform_8, window_bounds = array<i64: 8, 1>}, {pipeline_mode = #tpu.pipeline_mode<synchronous>, transform_indices = @transform_9, window_bounds = array<i64: 256, 64>}, {transform_indices = @transform_10, window_bounds = array<i64: 1, 8, 64>}]} {
    %c0 = arith.constant 0 : index
    %c0_0 = arith.constant 0 : index
    %c0_1 = arith.constant 0 : index
    %0 = vector.load %arg1[%c0, %c0_0, %c0_1] : memref<1x4x256xf32, #tpu.memory_space<vmem>>, vector<1x4x256xf32>
    %1 = vector.shape_cast %0 : vector<1x4x256xf32> to vector<4x256xf32>
    %c0_2 = arith.constant 0 : index
    %c0_3 = arith.constant 0 : index
    %2 = vector.load %arg6[%c0_2, %c0_3] : memref<1x256xi32, #tpu.memory_space<vmem>>, vector<1x256xi32>
    %c0_4 = arith.constant 0 : index
    %c0_5 = arith.constant 0 : index
    %3 = vector.load %arg7[%c0_4, %c0_5] : memref<1x256xi32, #tpu.memory_space<vmem>>, vector<1x256xi32>
    %cst = arith.constant 0.000000e+00 : f32
    %4 = vector.broadcast %cst : f32 to vector<4x256xf32>
    %5 = arith.maximumf %1, %4 : vector<4x256xf32>
    %6 = vector.extract_strided_slice %5 {offsets = [0, 239], sizes = [4, 17], strides = [1, 1]} : vector<4x256xf32> to vector<4x17xf32>
    %7 = vector.extract_strided_slice %5 {offsets = [0, 0], sizes = [4, 239], strides = [1, 1]} : vector<4x256xf32> to vector<4x239xf32>
    %8 = tpu.concatenate %6, %7 in 1 : vector<4x17xf32>, vector<4x239xf32> -> vector<4x256xf32>
    %c1_i32 = arith.constant 1 : i32
    %9 = vector.broadcast %c1_i32 : i32 to vector<1x256xi32>
    %10 = arith.cmpi sge, %2, %9 : vector<1x256xi32>
    %c1_i32_6 = arith.constant 1 : i32
    %11 = vector.broadcast %c1_i32_6 : i32 to vector<1x256xi32>
    %12 = arith.cmpi sge, %3, %11 : vector<1x256xi32>
    %13 = arith.andi %10, %12 : vector<1x256xi1>
    %cst_7 = arith.constant 0.000000e+00 : f32
    %14 = vector.shape_cast %13 : vector<1x256xi1> to vector<1x256xi1>
    %15 = vector.broadcast %14 : vector<1x256xi1> to vector<4x256xi1>
    %16 = vector.broadcast %cst_7 : f32 to vector<4x256xf32>
    %17 = arith.select %15, %8, %16 : vector<4x256xi1>, vector<4x256xf32>
    %18 = vector.extract_strided_slice %5 {offsets = [0, 240], sizes = [4, 16], strides = [1, 1]} : vector<4x256xf32> to vector<4x16xf32>
    %19 = vector.extract_strided_slice %5 {offsets = [0, 0], sizes = [4, 240], strides = [1, 1]} : vector<4x256xf32> to vector<4x240xf32>
    %20 = tpu.concatenate %18, %19 in 1 : vector<4x16xf32>, vector<4x240xf32> -> vector<4x256xf32>
    %c1_i32_8 = arith.constant 1 : i32
    %21 = vector.broadcast %c1_i32_8 : i32 to vector<1x256xi32>
    %22 = arith.cmpi sge, %2, %21 : vector<1x256xi32>
    %cst_9 = arith.constant 0.000000e+00 : f32
    %23 = vector.shape_cast %22 : vector<1x256xi1> to vector<1x256xi1>
    %24 = vector.broadcast %23 : vector<1x256xi1> to vector<4x256xi1>
    %25 = vector.broadcast %cst_9 : f32 to vector<4x256xf32>
    %26 = arith.select %24, %20, %25 : vector<4x256xi1>, vector<4x256xf32>
    %27 = vector.extract_strided_slice %5 {offsets = [0, 241], sizes = [4, 15], strides = [1, 1]} : vector<4x256xf32> to vector<4x15xf32>
    %28 = vector.extract_strided_slice %5 {offsets = [0, 0], sizes = [4, 241], strides = [1, 1]} : vector<4x256xf32> to vector<4x241xf32>
    %29 = tpu.concatenate %27, %28 in 1 : vector<4x15xf32>, vector<4x241xf32> -> vector<4x256xf32>
    %c1_i32_10 = arith.constant 1 : i32
    %30 = vector.broadcast %c1_i32_10 : i32 to vector<1x256xi32>
    %31 = arith.cmpi sge, %2, %30 : vector<1x256xi32>
    %c14_i32 = arith.constant 14 : i32
    %32 = vector.broadcast %c14_i32 : i32 to vector<1x256xi32>
    %33 = arith.cmpi sle, %3, %32 : vector<1x256xi32>
    %34 = arith.andi %31, %33 : vector<1x256xi1>
    %cst_11 = arith.constant 0.000000e+00 : f32
    %35 = vector.shape_cast %34 : vector<1x256xi1> to vector<1x256xi1>
    %36 = vector.broadcast %35 : vector<1x256xi1> to vector<4x256xi1>
    %37 = vector.broadcast %cst_11 : f32 to vector<4x256xf32>
    %38 = arith.select %36, %29, %37 : vector<4x256xi1>, vector<4x256xf32>
    %39 = vector.extract_strided_slice %5 {offsets = [0, 255], sizes = [4, 1], strides = [1, 1]} : vector<4x256xf32> to vector<4x1xf32>
    %40 = vector.extract_strided_slice %5 {offsets = [0, 0], sizes = [4, 255], strides = [1, 1]} : vector<4x256xf32> to vector<4x255xf32>
    %41 = tpu.concatenate %39, %40 in 1 : vector<4x1xf32>, vector<4x255xf32> -> vector<4x256xf32>
    %c1_i32_12 = arith.constant 1 : i32
    %42 = vector.broadcast %c1_i32_12 : i32 to vector<1x256xi32>
    %43 = arith.cmpi sge, %3, %42 : vector<1x256xi32>
    %cst_13 = arith.constant 0.000000e+00 : f32
    %44 = vector.shape_cast %43 : vector<1x256xi1> to vector<1x256xi1>
    %45 = vector.broadcast %44 : vector<1x256xi1> to vector<4x256xi1>
    %46 = vector.broadcast %cst_13 : f32 to vector<4x256xf32>
    %47 = arith.select %45, %41, %46 : vector<4x256xi1>, vector<4x256xf32>
    %48 = vector.extract_strided_slice %5 {offsets = [0, 1], sizes = [4, 255], strides = [1, 1]} : vector<4x256xf32> to vector<4x255xf32>
    %49 = vector.extract_strided_slice %5 {offsets = [0, 0], sizes = [4, 1], strides = [1, 1]} : vector<4x256xf32> to vector<4x1xf32>
    %50 = tpu.concatenate %48, %49 in 1 : vector<4x255xf32>, vector<4x1xf32> -> vector<4x256xf32>
    %c14_i32_14 = arith.constant 14 : i32
    %51 = vector.broadcast %c14_i32_14 : i32 to vector<1x256xi32>
    %52 = arith.cmpi sle, %3, %51 : vector<1x256xi32>
    %cst_15 = arith.constant 0.000000e+00 : f32
    %53 = vector.shape_cast %52 : vector<1x256xi1> to vector<1x256xi1>
    %54 = vector.broadcast %53 : vector<1x256xi1> to vector<4x256xi1>
    %55 = vector.broadcast %cst_15 : f32 to vector<4x256xf32>
    %56 = arith.select %54, %50, %55 : vector<4x256xi1>, vector<4x256xf32>
    %57 = vector.extract_strided_slice %5 {offsets = [0, 15], sizes = [4, 241], strides = [1, 1]} : vector<4x256xf32> to vector<4x241xf32>
    %58 = vector.extract_strided_slice %5 {offsets = [0, 0], sizes = [4, 15], strides = [1, 1]} : vector<4x256xf32> to vector<4x15xf32>
    %59 = tpu.concatenate %57, %58 in 1 : vector<4x241xf32>, vector<4x15xf32> -> vector<4x256xf32>
    %c14_i32_16 = arith.constant 14 : i32
    %60 = vector.broadcast %c14_i32_16 : i32 to vector<1x256xi32>
    %61 = arith.cmpi sle, %2, %60 : vector<1x256xi32>
    %c1_i32_17 = arith.constant 1 : i32
    %62 = vector.broadcast %c1_i32_17 : i32 to vector<1x256xi32>
    %63 = arith.cmpi sge, %3, %62 : vector<1x256xi32>
    %64 = arith.andi %61, %63 : vector<1x256xi1>
    %cst_18 = arith.constant 0.000000e+00 : f32
    %65 = vector.shape_cast %64 : vector<1x256xi1> to vector<1x256xi1>
    %66 = vector.broadcast %65 : vector<1x256xi1> to vector<4x256xi1>
    %67 = vector.broadcast %cst_18 : f32 to vector<4x256xf32>
    %68 = arith.select %66, %59, %67 : vector<4x256xi1>, vector<4x256xf32>
    %69 = vector.extract_strided_slice %5 {offsets = [0, 16], sizes = [4, 240], strides = [1, 1]} : vector<4x256xf32> to vector<4x240xf32>
    %70 = vector.extract_strided_slice %5 {offsets = [0, 0], sizes = [4, 16], strides = [1, 1]} : vector<4x256xf32> to vector<4x16xf32>
    %71 = tpu.concatenate %69, %70 in 1 : vector<4x240xf32>, vector<4x16xf32> -> vector<4x256xf32>
    %c14_i32_19 = arith.constant 14 : i32
    %72 = vector.broadcast %c14_i32_19 : i32 to vector<1x256xi32>
    %73 = arith.cmpi sle, %2, %72 : vector<1x256xi32>
    %cst_20 = arith.constant 0.000000e+00 : f32
    %74 = vector.shape_cast %73 : vector<1x256xi1> to vector<1x256xi1>
    %75 = vector.broadcast %74 : vector<1x256xi1> to vector<4x256xi1>
    %76 = vector.broadcast %cst_20 : f32 to vector<4x256xf32>
    %77 = arith.select %75, %71, %76 : vector<4x256xi1>, vector<4x256xf32>
    %78 = vector.extract_strided_slice %5 {offsets = [0, 17], sizes = [4, 239], strides = [1, 1]} : vector<4x256xf32> to vector<4x239xf32>
    %79 = vector.extract_strided_slice %5 {offsets = [0, 0], sizes = [4, 17], strides = [1, 1]} : vector<4x256xf32> to vector<4x17xf32>
    %80 = tpu.concatenate %78, %79 in 1 : vector<4x239xf32>, vector<4x17xf32> -> vector<4x256xf32>
    %c14_i32_21 = arith.constant 14 : i32
    %81 = vector.broadcast %c14_i32_21 : i32 to vector<1x256xi32>
    %82 = arith.cmpi sle, %2, %81 : vector<1x256xi32>
    %c14_i32_22 = arith.constant 14 : i32
    %83 = vector.broadcast %c14_i32_22 : i32 to vector<1x256xi32>
    %84 = arith.cmpi sle, %3, %83 : vector<1x256xi32>
    %85 = arith.andi %82, %84 : vector<1x256xi1>
    %cst_23 = arith.constant 0.000000e+00 : f32
    %86 = vector.shape_cast %85 : vector<1x256xi1> to vector<1x256xi1>
    %87 = vector.broadcast %86 : vector<1x256xi1> to vector<4x256xi1>
    %88 = vector.broadcast %cst_23 : f32 to vector<4x256xf32>
    %89 = arith.select %87, %80, %88 : vector<4x256xi1>, vector<4x256xf32>
    %90 = tpu.concatenate %17, %26, %38, %47, %5, %56, %68, %77, %89 in 0 : vector<4x256xf32>, vector<4x256xf32>, vector<4x256xf32>, vector<4x256xf32>, vector<4x256xf32>, vector<4x256xf32>, vector<4x256xf32>, vector<4x256xf32>, vector<4x256xf32> -> vector<36x256xf32>
    %c0_24 = arith.constant 0 : index
    %c0_25 = arith.constant 0 : index
    %91 = vector.load %arg2[%c0_24, %c0_25] : memref<4x36xbf16, #tpu.memory_space<vmem>>, vector<4x36xbf16>
    %92 = arith.truncf %90 : vector<36x256xf32> to vector<36x256xbf16>
    %cst_26 = arith.constant dense<0.000000e+00> : vector<4x256xf32>
    %93 = tpu.matmul %91, %92, %cst_26 {dimension_numbers = #tpu.dot_dimension_numbers<[1], [0], [0], [1], [0, 0, 1, 1], [], []>} : vector<4x36xbf16>, vector<36x256xbf16>, vector<4x256xf32> -> vector<4x256xf32>
    %c0_27 = arith.constant 0 : index
    %c0_28 = arith.constant 0 : index
    %94 = vector.load %arg3[%c0_27, %c0_28] : memref<4x1xf32, #tpu.memory_space<vmem>>, vector<4x1xf32>
    %95 = vector.broadcast %94 : vector<4x1xf32> to vector<4x256xf32>
    %96 = arith.addf %93, %95 : vector<4x256xf32>
    %cst_29 = arith.constant 0.000000e+00 : f32
    %97 = vector.broadcast %cst_29 : f32 to vector<4x256xf32>
    %98 = arith.maximumf %96, %97 : vector<4x256xf32>
    %99 = vector.extract_strided_slice %98 {offsets = [0, 239], sizes = [4, 17], strides = [1, 1]} : vector<4x256xf32> to vector<4x17xf32>
    %100 = vector.extract_strided_slice %98 {offsets = [0, 0], sizes = [4, 239], strides = [1, 1]} : vector<4x256xf32> to vector<4x239xf32>
    %101 = tpu.concatenate %99, %100 in 1 : vector<4x17xf32>, vector<4x239xf32> -> vector<4x256xf32>
    %c1_i32_30 = arith.constant 1 : i32
    %102 = vector.broadcast %c1_i32_30 : i32 to vector<1x256xi32>
    %103 = arith.cmpi sge, %2, %102 : vector<1x256xi32>
    %c1_i32_31 = arith.constant 1 : i32
    %104 = vector.broadcast %c1_i32_31 : i32 to vector<1x256xi32>
    %105 = arith.cmpi sge, %3, %104 : vector<1x256xi32>
    %106 = arith.andi %103, %105 : vector<1x256xi1>
    %cst_32 = arith.constant 0.000000e+00 : f32
    %107 = vector.shape_cast %106 : vector<1x256xi1> to vector<1x256xi1>
    %108 = vector.broadcast %107 : vector<1x256xi1> to vector<4x256xi1>
    %109 = vector.broadcast %cst_32 : f32 to vector<4x256xf32>
    %110 = arith.select %108, %101, %109 : vector<4x256xi1>, vector<4x256xf32>
    %111 = vector.extract_strided_slice %98 {offsets = [0, 240], sizes = [4, 16], strides = [1, 1]} : vector<4x256xf32> to vector<4x16xf32>
    %112 = vector.extract_strided_slice %98 {offsets = [0, 0], sizes = [4, 240], strides = [1, 1]} : vector<4x256xf32> to vector<4x240xf32>
    %113 = tpu.concatenate %111, %112 in 1 : vector<4x16xf32>, vector<4x240xf32> -> vector<4x256xf32>
    %c1_i32_33 = arith.constant 1 : i32
    %114 = vector.broadcast %c1_i32_33 : i32 to vector<1x256xi32>
    %115 = arith.cmpi sge, %2, %114 : vector<1x256xi32>
    %cst_34 = arith.constant 0.000000e+00 : f32
    %116 = vector.shape_cast %115 : vector<1x256xi1> to vector<1x256xi1>
    %117 = vector.broadcast %116 : vector<1x256xi1> to vector<4x256xi1>
    %118 = vector.broadcast %cst_34 : f32 to vector<4x256xf32>
    %119 = arith.select %117, %113, %118 : vector<4x256xi1>, vector<4x256xf32>
    %120 = vector.extract_strided_slice %98 {offsets = [0, 241], sizes = [4, 15], strides = [1, 1]} : vector<4x256xf32> to vector<4x15xf32>
    %121 = vector.extract_strided_slice %98 {offsets = [0, 0], sizes = [4, 241], strides = [1, 1]} : vector<4x256xf32> to vector<4x241xf32>
    %122 = tpu.concatenate %120, %121 in 1 : vector<4x15xf32>, vector<4x241xf32> -> vector<4x256xf32>
    %c1_i32_35 = arith.constant 1 : i32
    %123 = vector.broadcast %c1_i32_35 : i32 to vector<1x256xi32>
    %124 = arith.cmpi sge, %2, %123 : vector<1x256xi32>
    %c14_i32_36 = arith.constant 14 : i32
    %125 = vector.broadcast %c14_i32_36 : i32 to vector<1x256xi32>
    %126 = arith.cmpi sle, %3, %125 : vector<1x256xi32>
    %127 = arith.andi %124, %126 : vector<1x256xi1>
    %cst_37 = arith.constant 0.000000e+00 : f32
    %128 = vector.shape_cast %127 : vector<1x256xi1> to vector<1x256xi1>
    %129 = vector.broadcast %128 : vector<1x256xi1> to vector<4x256xi1>
    %130 = vector.broadcast %cst_37 : f32 to vector<4x256xf32>
    %131 = arith.select %129, %122, %130 : vector<4x256xi1>, vector<4x256xf32>
    %132 = vector.extract_strided_slice %98 {offsets = [0, 255], sizes = [4, 1], strides = [1, 1]} : vector<4x256xf32> to vector<4x1xf32>
    %133 = vector.extract_strided_slice %98 {offsets = [0, 0], sizes = [4, 255], strides = [1, 1]} : vector<4x256xf32> to vector<4x255xf32>
    %134 = tpu.concatenate %132, %133 in 1 : vector<4x1xf32>, vector<4x255xf32> -> vector<4x256xf32>
    %c1_i32_38 = arith.constant 1 : i32
    %135 = vector.broadcast %c1_i32_38 : i32 to vector<1x256xi32>
    %136 = arith.cmpi sge, %3, %135 : vector<1x256xi32>
    %cst_39 = arith.constant 0.000000e+00 : f32
    %137 = vector.shape_cast %136 : vector<1x256xi1> to vector<1x256xi1>
    %138 = vector.broadcast %137 : vector<1x256xi1> to vector<4x256xi1>
    %139 = vector.broadcast %cst_39 : f32 to vector<4x256xf32>
    %140 = arith.select %138, %134, %139 : vector<4x256xi1>, vector<4x256xf32>
    %141 = vector.extract_strided_slice %98 {offsets = [0, 1], sizes = [4, 255], strides = [1, 1]} : vector<4x256xf32> to vector<4x255xf32>
    %142 = vector.extract_strided_slice %98 {offsets = [0, 0], sizes = [4, 1], strides = [1, 1]} : vector<4x256xf32> to vector<4x1xf32>
    %143 = tpu.concatenate %141, %142 in 1 : vector<4x255xf32>, vector<4x1xf32> -> vector<4x256xf32>
    %c14_i32_40 = arith.constant 14 : i32
    %144 = vector.broadcast %c14_i32_40 : i32 to vector<1x256xi32>
    %145 = arith.cmpi sle, %3, %144 : vector<1x256xi32>
    %cst_41 = arith.constant 0.000000e+00 : f32
    %146 = vector.shape_cast %145 : vector<1x256xi1> to vector<1x256xi1>
    %147 = vector.broadcast %146 : vector<1x256xi1> to vector<4x256xi1>
    %148 = vector.broadcast %cst_41 : f32 to vector<4x256xf32>
    %149 = arith.select %147, %143, %148 : vector<4x256xi1>, vector<4x256xf32>
    %150 = vector.extract_strided_slice %98 {offsets = [0, 15], sizes = [4, 241], strides = [1, 1]} : vector<4x256xf32> to vector<4x241xf32>
    %151 = vector.extract_strided_slice %98 {offsets = [0, 0], sizes = [4, 15], strides = [1, 1]} : vector<4x256xf32> to vector<4x15xf32>
    %152 = tpu.concatenate %150, %151 in 1 : vector<4x241xf32>, vector<4x15xf32> -> vector<4x256xf32>
    %c14_i32_42 = arith.constant 14 : i32
    %153 = vector.broadcast %c14_i32_42 : i32 to vector<1x256xi32>
    %154 = arith.cmpi sle, %2, %153 : vector<1x256xi32>
    %c1_i32_43 = arith.constant 1 : i32
    %155 = vector.broadcast %c1_i32_43 : i32 to vector<1x256xi32>
    %156 = arith.cmpi sge, %3, %155 : vector<1x256xi32>
    %157 = arith.andi %154, %156 : vector<1x256xi1>
    %cst_44 = arith.constant 0.000000e+00 : f32
    %158 = vector.shape_cast %157 : vector<1x256xi1> to vector<1x256xi1>
    %159 = vector.broadcast %158 : vector<1x256xi1> to vector<4x256xi1>
    %160 = vector.broadcast %cst_44 : f32 to vector<4x256xf32>
    %161 = arith.select %159, %152, %160 : vector<4x256xi1>, vector<4x256xf32>
    %162 = vector.extract_strided_slice %98 {offsets = [0, 16], sizes = [4, 240], strides = [1, 1]} : vector<4x256xf32> to vector<4x240xf32>
    %163 = vector.extract_strided_slice %98 {offsets = [0, 0], sizes = [4, 16], strides = [1, 1]} : vector<4x256xf32> to vector<4x16xf32>
    %164 = tpu.concatenate %162, %163 in 1 : vector<4x240xf32>, vector<4x16xf32> -> vector<4x256xf32>
    %c14_i32_45 = arith.constant 14 : i32
    %165 = vector.broadcast %c14_i32_45 : i32 to vector<1x256xi32>
    %166 = arith.cmpi sle, %2, %165 : vector<1x256xi32>
    %cst_46 = arith.constant 0.000000e+00 : f32
    %167 = vector.shape_cast %166 : vector<1x256xi1> to vector<1x256xi1>
    %168 = vector.broadcast %167 : vector<1x256xi1> to vector<4x256xi1>
    %169 = vector.broadcast %cst_46 : f32 to vector<4x256xf32>
    %170 = arith.select %168, %164, %169 : vector<4x256xi1>, vector<4x256xf32>
    %171 = vector.extract_strided_slice %98 {offsets = [0, 17], sizes = [4, 239], strides = [1, 1]} : vector<4x256xf32> to vector<4x239xf32>
    %172 = vector.extract_strided_slice %98 {offsets = [0, 0], sizes = [4, 17], strides = [1, 1]} : vector<4x256xf32> to vector<4x17xf32>
    %173 = tpu.concatenate %171, %172 in 1 : vector<4x239xf32>, vector<4x17xf32> -> vector<4x256xf32>
    %c14_i32_47 = arith.constant 14 : i32
    %174 = vector.broadcast %c14_i32_47 : i32 to vector<1x256xi32>
    %175 = arith.cmpi sle, %2, %174 : vector<1x256xi32>
    %c14_i32_48 = arith.constant 14 : i32
    %176 = vector.broadcast %c14_i32_48 : i32 to vector<1x256xi32>
    %177 = arith.cmpi sle, %3, %176 : vector<1x256xi32>
    %178 = arith.andi %175, %177 : vector<1x256xi1>
    %cst_49 = arith.constant 0.000000e+00 : f32
    %179 = vector.shape_cast %178 : vector<1x256xi1> to vector<1x256xi1>
    %180 = vector.broadcast %179 : vector<1x256xi1> to vector<4x256xi1>
    %181 = vector.broadcast %cst_49 : f32 to vector<4x256xf32>
    %182 = arith.select %180, %173, %181 : vector<4x256xi1>, vector<4x256xf32>
    %183 = tpu.concatenate %110, %119, %131, %140, %98, %149, %161, %170, %182 in 0 : vector<4x256xf32>, vector<4x256xf32>, vector<4x256xf32>, vector<4x256xf32>, vector<4x256xf32>, vector<4x256xf32>, vector<4x256xf32>, vector<4x256xf32>, vector<4x256xf32> -> vector<36x256xf32>
    %c0_50 = arith.constant 0 : index
    %c0_51 = arith.constant 0 : index
    %184 = vector.load %arg4[%c0_50, %c0_51] : memref<8x36xbf16, #tpu.memory_space<vmem>>, vector<8x36xbf16>
    %185 = arith.truncf %183 : vector<36x256xf32> to vector<36x256xbf16>
    %cst_52 = arith.constant dense<0.000000e+00> : vector<8x256xf32>
    %186 = tpu.matmul %184, %185, %cst_52 {dimension_numbers = #tpu.dot_dimension_numbers<[1], [0], [0], [1], [0, 0, 1, 1], [], []>} : vector<8x36xbf16>, vector<36x256xbf16>, vector<8x256xf32> -> vector<8x256xf32>
    %c0_53 = arith.constant 0 : index
    %c0_54 = arith.constant 0 : index
    %187 = vector.load %arg5[%c0_53, %c0_54] : memref<8x1xf32, #tpu.memory_space<vmem>>, vector<8x1xf32>
    %188 = vector.broadcast %187 : vector<8x1xf32> to vector<8x256xf32>
    %189 = arith.addf %186, %188 : vector<8x256xf32>
    %c0_55 = arith.constant 0 : index
    %c0_56 = arith.constant 0 : index
    %190 = vector.load %arg8[%c0_55, %c0_56] : memref<8x4xbf16, #tpu.memory_space<vmem>>, vector<8x4xbf16>
    %191 = arith.truncf %1 : vector<4x256xf32> to vector<4x256xbf16>
    %cst_57 = arith.constant dense<0.000000e+00> : vector<8x256xf32>
    %192 = tpu.matmul %190, %191, %cst_57 {dimension_numbers = #tpu.dot_dimension_numbers<[1], [0], [0], [1], [0, 0, 1, 1], [], []>} : vector<8x4xbf16>, vector<4x256xbf16>, vector<8x256xf32> -> vector<8x256xf32>
    %c0_58 = arith.constant 0 : index
    %c0_59 = arith.constant 0 : index
    %193 = vector.load %arg9[%c0_58, %c0_59] : memref<8x1xf32, #tpu.memory_space<vmem>>, vector<8x1xf32>
    %194 = vector.broadcast %193 : vector<8x1xf32> to vector<8x256xf32>
    %195 = arith.addf %192, %194 : vector<8x256xf32>
    %196 = arith.addf %189, %195 : vector<8x256xf32>
    %c0_60 = arith.constant 0 : index
    %c0_61 = arith.constant 0 : index
    %197 = vector.load %arg10[%c0_60, %c0_61] : memref<256x64xf32, #tpu.memory_space<vmem>>, vector<256x64xf32>
    %cst_62 = arith.constant dense<0.000000e+00> : vector<8x64xf32>
    %198 = tpu.matmul %196, %197, %cst_62 {dimension_numbers = #tpu.dot_dimension_numbers<[1], [0], [0], [1], [0, 0, 1, 1], [], []>} : vector<8x256xf32>, vector<256x64xf32>, vector<8x64xf32> -> vector<8x64xf32>
    %c0_63 = arith.constant 0 : index
    %c0_64 = arith.constant 0 : index
    %c0_65 = arith.constant 0 : index
    %199 = vector.load %arg11[%c0_63, %c0_64, %c0_65] : memref<1x8x64xf32, #tpu.memory_space<vmem>>, vector<1x8x64xf32>
    %200 = vector.shape_cast %199 : vector<1x8x64xf32> to vector<8x64xf32>
    %201 = vector.shape_cast %198 : vector<8x64xf32> to vector<1x8x64xf32>
    tpu.vector_store %arg11[%c0_63, %c0_64, %c0_65], %201 {strides = array<i32>} : memref<1x8x64xf32, #tpu.memory_space<vmem>>, vector<1x8x64xf32>,
    return
  }
  func.func @transform_0(%arg0: i32) -> (i32, i32, i32) {
    %c0_i32 = arith.constant 0 : i32
    %c0_i32_0 = arith.constant 0 : i32
    %c0_i32_1 = arith.constant 0 : i32
    return %arg0, %c0_i32, %c0_i32_0 : i32, i32, i32
  }
  func.func @transform_1(%arg0: i32) -> (i32, i32) {
    %c0_i32 = arith.constant 0 : i32
    %c0_i32_0 = arith.constant 0 : i32
    %c0_i32_1 = arith.constant 0 : i32
    return %c0_i32, %c0_i32_0 : i32, i32
  }
  func.func @transform_2(%arg0: i32) -> (i32, i32) {
    %c0_i32 = arith.constant 0 : i32
    %c0_i32_0 = arith.constant 0 : i32
    %c0_i32_1 = arith.constant 0 : i32
    return %c0_i32, %c0_i32_0 : i32, i32
  }
  func.func @transform_3(%arg0: i32) -> (i32, i32) {
    %c0_i32 = arith.constant 0 : i32
    %c0_i32_0 = arith.constant 0 : i32
    %c0_i32_1 = arith.constant 0 : i32
    return %c0_i32, %c0_i32_0 : i32, i32
  }
  func.func @transform_4(%arg0: i32) -> (i32, i32) {
    %c0_i32 = arith.constant 0 : i32
    %c0_i32_0 = arith.constant 0 : i32
    %c0_i32_1 = arith.constant 0 : i32
    return %c0_i32, %c0_i32_0 : i32, i32
  }
  func.func @transform_5(%arg0: i32) -> (i32, i32) {
    %c0_i32 = arith.constant 0 : i32
    %c0_i32_0 = arith.constant 0 : i32
    %c0_i32_1 = arith.constant 0 : i32
    return %c0_i32, %c0_i32_0 : i32, i32
  }
  func.func @transform_6(%arg0: i32) -> (i32, i32) {
    %c0_i32 = arith.constant 0 : i32
    %c0_i32_0 = arith.constant 0 : i32
    %c0_i32_1 = arith.constant 0 : i32
    return %c0_i32, %c0_i32_0 : i32, i32
  }
  func.func @transform_7(%arg0: i32) -> (i32, i32) {
    %c0_i32 = arith.constant 0 : i32
    %c0_i32_0 = arith.constant 0 : i32
    %c0_i32_1 = arith.constant 0 : i32
    return %c0_i32, %c0_i32_0 : i32, i32
  }
  func.func @transform_8(%arg0: i32) -> (i32, i32) {
    %c0_i32 = arith.constant 0 : i32
    %c0_i32_0 = arith.constant 0 : i32
    %c0_i32_1 = arith.constant 0 : i32
    return %c0_i32, %c0_i32_0 : i32, i32
  }
  func.func @transform_9(%arg0: i32) -> (i32, i32) {
    %c0_i32 = arith.constant 0 : i32
    %c0_i32_0 = arith.constant 0 : i32
    %c0_i32_1 = arith.constant 0 : i32
    return %c0_i32, %c0_i32_0 : i32, i32
  }
  func.func @transform_10(%arg0: i32) -> (i32, i32, i32) {
    %c0_i32 = arith.constant 0 : i32
    %c0_i32_0 = arith.constant 0 : i32
    %c0_i32_1 = arith.constant 0 : i32
    return %arg0, %c0_i32, %c0_i32_0 : i32, i32, i32
  }
}

</mosaic_0001>

<llo_original>
// kernel: tpu_custom_call.1
$region0: #{tpu_custom_call.1}
  #allocation0 [shape = 'u32[]', space=smem, size = 0x4, offset = 0x4, fixed_abs, tag = 'smem constant byte address 0x4 - core index']
  #allocation1 [shape = 'u32[144,128]{1,0:T(1,128)}', space=vmem, size = 0x12000, scoped, tag = 'internal scratch']
  %s0 = inlined_call_operand.vmem [shape: f32[2,4,256], index: 0, kind: input, shape index: {}]
  %s1 = inlined_call_operand.vmem [shape: bf16[4,36], index: 1, kind: input, shape index: {}]
  %s2 = inlined_call_operand.vmem [shape: f32[4,1], index: 2, kind: input, shape index: {}]
  %s3 = inlined_call_operand.vmem [shape: bf16[8,36], index: 3, kind: input, shape index: {}]
  %s4 = inlined_call_operand.vmem [shape: f32[8,1], index: 4, kind: input, shape index: {}]
  %s5 = inlined_call_operand.vmem [shape: s32[1,256], index: 5, kind: input, shape index: {}]
  %s6 = inlined_call_operand.vmem [shape: s32[1,256], index: 6, kind: input, shape index: {}]
  %s7 = inlined_call_operand.vmem [shape: bf16[8,4], index: 7, kind: input, shape index: {}]
  %s8 = inlined_call_operand.vmem [shape: f32[8,1], index: 8, kind: input, shape index: {}]
  %s9 = inlined_call_operand.vmem [shape: f32[256,64], index: 9, kind: input, shape index: {}]
  %s10 = inlined_call_operand.hbm [shape: f32[2,8,64], index: 10, kind: output, shape index: {}]
  %s11 = sld [smem:[#allocation0]]
  $region73: #{tpu_custom_call.1} parent=0
    _
  %s13 = ssub.s32 1, %s11
  %s14 = scalar_select 0, %s13, %s11
  $region1: #{tpu_custom_call.1} parent=0
    #allocation2 [shape = 'u8[8192]{0}', space=vmem, size = 0x2000, scoped, tag = 'output window, operand 0']
    #allocation3 [shape = 's32[2]{0}', space=sflag, size = 0x8, scoped, tag = 'scoped memory for tpu_custom_call.1']
    %15 = vsyncpa [#allocation3], 0
    %s16 = scalar_lea.sflag [#allocation3], 1
    %17 = vsyncpa %s16, 0
    loop: start=0, step=1, limit=4
    $region2: #{tpu_custom_call.1} parent=1 // loop_pre_header
      _
    $region3: #{tpu_custom_call.1} parent=1 // loop_header
      %s19 = sphi 0, %s23
      %p20 = scmp.ge.s32.totalorder %s19, 4
      %s29 = sphi 0, %s31
      %s32 = sphi 0, %s29
      %s33 = sphi 0, %s32
      %s49 = sphi 0, %s33
      %s53 = sphi 0, %s53
      %s55 = sphi 0, %s53
      %s56 = sphi 0, %s55
      %s70 = sphi 0, %s56
      %s74 = sphi 0, %s74
      %s76 = sphi 0, %s74
      %s77 = sphi 0, %s76
      %s91 = sphi 0, %s77
      %s95 = sphi 0, %s95
      %s97 = sphi 0, %s95
      %s98 = sphi 0, %s97
      %s112 = sphi 0, %s98
      %s116 = sphi 0, %s116
      %s118 = sphi 0, %s116
      %s119 = sphi 0, %s118
      %s133 = sphi 0, %s119
      %s137 = sphi 0, %s137
      %s139 = sphi 0, %s137
      %s140 = sphi 0, %s139
      %s154 = sphi 0, %s140
      %s158 = sphi 0, %s158
      %s160 = sphi 0, %s158
      %s161 = sphi 0, %s160
      %s175 = sphi 0, %s161
      %s179 = sphi 0, %s179
      %s181 = sphi 0, %s179
      %s182 = sphi 0, %s181
      %s196 = sphi 0, %s182
      %s200 = sphi 0, %s200
      %s202 = sphi 0, %s200
      %s203 = sphi 0, %s202
      %s217 = sphi 0, %s203
      %s221 = sphi 0, %s221
      %s223 = sphi 0, %s221
      %s224 = sphi 0, %s223
      %s238 = sphi 0, %s224
      %s244 = sphi 0, %s246
      %s247 = sphi 0, %s244
      %s248 = sphi 0, %s247
      %s264 = sphi 0, %s248
    $region4: #{tpu_custom_call.1} parent=1 // loop_header_branch
      %22 = sbr.rel (%p20) target = $region8
    $region5: #{tpu_custom_call.1} parent=1 // loop_body
      %s24 = ssub.s32 %s19, 1
      %s25 = ssub.s32 %s19, 2
      %s26 = sadd.s32 %s19, 1
      %s27 = ssub.s32 %s19, %s26
      %p28 = scmp.eq.s32.totalorder %s27, 0
      %s30 = sadd.s32 %s29, 1
      %s31 = scalar_select %p28, %s29, %s30
      %p34 = pneg %p28
      %p35 = scmp.eq.s32.totalorder %s19, 1
      %p36 = por %p34, %p35
      %p37 = scmp.ne.s32.totalorder %s29, %s32
      %p38 = scmp.eq.s32.totalorder %s19, 0
      %p39 = por %p37, %p38
      %p40 = scmp.ne.s32.totalorder %s29, %s32
      %p41 = scmp.eq.s32.totalorder %s24, 1
      %p42 = por %p40, %p41
      %p43 = scmp.ne.s32.totalorder %s32, %s33
      %p44 = scmp.eq.s32.totalorder %s24, 0
      %p45 = por %p43, %p44
      %p46 = scmp.ne.s32.totalorder %s32, %s33
      %p47 = scmp.eq.s32.totalorder %s25, 1
      %p48 = por %p46, %p47
      %p50 = scmp.ne.s32.totalorder %s33, %s49
      %p51 = scmp.eq.s32.totalorder %s25, 0
      %p52 = por %p50, %p51
      %s54 = sadd.s32 %s53, 1
      %p57 = scmp.eq.s32.totalorder %s19, 1
      %p58 = scmp.ne.s32.totalorder %s53, %s55
      %p59 = scmp.eq.s32.totalorder %s19, 0
      %p60 = por %p58, %p59
      %p61 = scmp.ne.s32.totalorder %s53, %s55
      %p62 = scmp.eq.s32.totalorder %s24, 1
      %p63 = por %p61, %p62
      %p64 = scmp.ne.s32.totalorder %s55, %s56
      %p65 = scmp.eq.s32.totalorder %s24, 0
      %p66 = por %p64, %p65
      %p67 = scmp.ne.s32.totalorder %s55, %s56
      %p68 = scmp.eq.s32.totalorder %s25, 1
      %p69 = por %p67, %p68
      %p71 = scmp.ne.s32.totalorder %s56, %s70
      %p72 = scmp.eq.s32.totalorder %s25, 0
      %p73 = por %p71, %p72
      %s75 = sadd.s32 %s74, 1
      %p78 = scmp.eq.s32.totalorder %s19, 1
      %p79 = scmp.ne.s32.totalorder %s74, %s76
      %p80 = scmp.eq.s32.totalorder %s19, 0
      %p81 = por %p79, %p80
      %p82 = scmp.ne.s32.totalorder %s74, %s76
      %p83 = scmp.eq.s32.totalorder %s24, 1
      %p84 = por %p82, %p83
      %p85 = scmp.ne.s32.totalorder %s76, %s77
      %p86 = scmp.eq.s32.totalorder %s24, 0
      %p87 = por %p85, %p86
      %p88 = scmp.ne.s32.totalorder %s76, %s77
      %p89 = scmp.eq.s32.totalorder %s25, 1
      %p90 = por %p88, %p89
      %p92 = scmp.ne.s32.totalorder %s77, %s91
      %p93 = scmp.eq.s32.totalorder %s25, 0
      %p94 = por %p92, %p93
      %s96 = sadd.s32 %s95, 1
      %p99 = scmp.eq.s32.totalorder %s19, 1
      %p100 = scmp.ne.s32.totalorder %s95, %s97
      %p101 = scmp.eq.s32.totalorder %s19, 0
      %p102 = por %p100, %p101
      %p103 = scmp.ne.s32.totalorder %s95, %s97
      %p104 = scmp.eq.s32.totalorder %s24, 1
      %p105 = por %p103, %p104
      %p106 = scmp.ne.s32.totalorder %s97, %s98
      %p107 = scmp.eq.s32.totalorder %s24, 0
      %p108 = por %p106, %p107
      %p109 = scmp.ne.s32.totalorder %s97, %s98
      %p110 = scmp.eq.s32.totalorder %s25, 1
      %p111 = por %p109, %p110
      %p113 = scmp.ne.s32.totalorder %s98, %s112
      %p114 = scmp.eq.s32.totalorder %s25, 0
      %p115 = por %p113, %p114
      %s117 = sadd.s32 %s116, 1
      %p120 = scmp.eq.s32.totalorder %s19, 1
      %p121 = scmp.ne.s32.totalorder %s116, %s118
      %p122 = scmp.eq.s32.totalorder %s19, 0
      %p123 = por %p121, %p122
      %p124 = scmp.ne.s32.totalorder %s116, %s118
      %p125 = scmp.eq.s32.totalorder %s24, 1
      %p126 = por %p124, %p125
      %p127 = scmp.ne.s32.totalorder %s118, %s119
      %p128 = scmp.eq.s32.totalorder %s24, 0
      %p129 = por %p127, %p128
      %p130 = scmp.ne.s32.totalorder %s118, %s119
      %p131 = scmp.eq.s32.totalorder %s25, 1
      %p132 = por %p130, %p131
      %p134 = scmp.ne.s32.totalorder %s119, %s133
      %p135 = scmp.eq.s32.totalorder %s25, 0
      %p136 = por %p134, %p135
      %s138 = sadd.s32 %s137, 1
      %p141 = scmp.eq.s32.totalorder %s19, 1
      %p142 = scmp.ne.s32.totalorder %s137, %s139
      %p143 = scmp.eq.s32.totalorder %s19, 0
      %p144 = por %p142, %p143
      %p145 = scmp.ne.s32.totalorder %s137, %s139
      %p146 = scmp.eq.s32.totalorder %s24, 1
      %p147 = por %p145, %p146
      %p148 = scmp.ne.s32.totalorder %s139, %s140
      %p149 = scmp.eq.s32.totalorder %s24, 0
      %p150 = por %p148, %p149
      %p151 = scmp.ne.s32.totalorder %s139, %s140
      %p152 = scmp.eq.s32.totalorder %s25, 1
      %p153 = por %p151, %p152
      %p155 = scmp.ne.s32.totalorder %s140, %s154
      %p156 = scmp.eq.s32.totalorder %s25, 0
      %p157 = por %p155, %p156
      %s159 = sadd.s32 %s158, 1
      %p162 = scmp.eq.s32.totalorder %s19, 1
      %p163 = scmp.ne.s32.totalorder %s158, %s160
      %p164 = scmp.eq.s32.totalorder %s19, 0
      %p165 = por %p163, %p164
      %p166 = scmp.ne.s32.totalorder %s158, %s160
      %p167 = scmp.eq.s32.totalorder %s24, 1
      %p168 = por %p166, %p167
      %p169 = scmp.ne.s32.totalorder %s160, %s161
      %p170 = scmp.eq.s32.totalorder %s24, 0
      %p171 = por %p169, %p170
      %p172 = scmp.ne.s32.totalorder %s160, %s161
      %p173 = scmp.eq.s32.totalorder %s25, 1
      %p174 = por %p172, %p173
      %p176 = scmp.ne.s32.totalorder %s161, %s175
      %p177 = scmp.eq.s32.totalorder %s25, 0
      %p178 = por %p176, %p177
      %s180 = sadd.s32 %s179, 1
      %p183 = scmp.eq.s32.totalorder %s19, 1
      %p184 = scmp.ne.s32.totalorder %s179, %s181
      %p185 = scmp.eq.s32.totalorder %s19, 0
      %p186 = por %p184, %p185
      %p187 = scmp.ne.s32.totalorder %s179, %s181
      %p188 = scmp.eq.s32.totalorder %s24, 1
      %p189 = por %p187, %p188
      %p190 = scmp.ne.s32.totalorder %s181, %s182
      %p191 = scmp.eq.s32.totalorder %s24, 0
      %p192 = por %p190, %p191
      %p193 = scmp.ne.s32.totalorder %s181, %s182
      %p194 = scmp.eq.s32.totalorder %s25, 1
      %p195 = por %p193, %p194
      %p197 = scmp.ne.s32.totalorder %s182, %s196
      %p198 = scmp.eq.s32.totalorder %s25, 0
      %p199 = por %p197, %p198
      %s201 = sadd.s32 %s200, 1
      %p204 = scmp.eq.s32.totalorder %s19, 1
      %p205 = scmp.ne.s32.totalorder %s200, %s202
      %p206 = scmp.eq.s32.totalorder %s19, 0
      %p207 = por %p205, %p206
      %p208 = scmp.ne.s32.totalorder %s200, %s202
      %p209 = scmp.eq.s32.totalorder %s24, 1
      %p210 = por %p208, %p209
      %p211 = scmp.ne.s32.totalorder %s202, %s203
      %p212 = scmp.eq.s32.totalorder %s24, 0
      %p213 = por %p211, %p212
      %p214 = scmp.ne.s32.totalorder %s202, %s203
      %p215 = scmp.eq.s32.totalorder %s25, 1
      %p216 = por %p214, %p215
      %p218 = scmp.ne.s32.totalorder %s203, %s217
      %p219 = scmp.eq.s32.totalorder %s25, 0
      %p220 = por %p218, %p219
      %s222 = sadd.s32 %s221, 1
      %p225 = scmp.eq.s32.totalorder %s19, 1
      %p226 = scmp.ne.s32.totalorder %s221, %s223
      %p227 = scmp.eq.s32.totalorder %s19, 0
      %p228 = por %p226, %p227
      %p229 = scmp.ne.s32.totalorder %s221, %s223
      %p230 = scmp.eq.s32.totalorder %s24, 1
      %p231 = por %p229, %p230
      %p232 = scmp.ne.s32.totalorder %s223, %s224
      %p233 = scmp.eq.s32.totalorder %s24, 0
      %p234 = por %p232, %p233
      %p235 = scmp.ne.s32.totalorder %s223, %s224
      %p236 = scmp.eq.s32.totalorder %s25, 1
      %p237 = por %p235, %p236
      %p239 = scmp.ne.s32.totalorder %s224, %s238
      %p240 = scmp.eq.s32.totalorder %s25, 0
      %p241 = por %p239, %p240
      %s242 = ssub.s32 %s19, %s26
      %p243 = scmp.eq.s32.totalorder %s242, 0
      %s245 = sadd.s32 %s244, 1
      %s246 = scalar_select %p243, %s244, %s245
      %p249 = pneg %p243
      %p250 = scmp.eq.s32.totalorder %s19, 1
      %p251 = por %p249, %p250
      %p252 = scmp.ne.s32.totalorder %s244, %s247
      %p253 = scmp.eq.s32.totalorder %s19, 0
      %p254 = por %p252, %p253
      %p255 = scmp.ne.s32.totalorder %s244, %s247
      %p256 = scmp.eq.s32.totalorder %s24, 1
      %p257 = por %p255, %p256
      %p258 = scmp.ne.s32.totalorder %s247, %s248
      %p259 = scmp.eq.s32.totalorder %s24, 0
      %p260 = por %p258, %p259
      %p261 = scmp.ne.s32.totalorder %s247, %s248
      %p262 = scmp.eq.s32.totalorder %s25, 1
      %p263 = por %p261, %p262
      %p265 = scmp.ne.s32.totalorder %s248, %s264
      %p266 = scmp.eq.s32.totalorder %s25, 0
      %p267 = por %p265, %p266
      %p268 = scmp.le.s32.totalorder 1, %s19
      %p269 = scmp.lt.s32.totalorder %s19, 3
      %p270 = pnand %p268, %p269
      %p271 = pneg %p270
      // Predicated region
      $region9: #{tpu_custom_call.1} parent=5 // pred_check
        _
      $region10: #{tpu_custom_call.1} parent=5 // pred_check_branch
        %273 = sbr.rel (%p270) target = $region12
      $region11: #{tpu_custom_call.1} parent=5 // pred_region
        %s274 = ssub.s32 %s19, 1
        // Predicated region
        $region13: #{tpu_custom_call.1} parent=11 // pred_check
          %p275 = pneg %p66
        $region14: #{tpu_custom_call.1} parent=11 // pred_check_branch
          %277 = sbr.rel (%p275) target = $region16
        $region15: #{tpu_custom_call.1} parent=11 // pred_region
          _
        $region16: #{tpu_custom_call.1} parent=11 // pred_fallthru
          _
        // Predicated region
        $region17: #{tpu_custom_call.1} parent=11 // pred_check
          %p278 = pneg %p87
        $region18: #{tpu_custom_call.1} parent=11 // pred_check_branch
          %280 = sbr.rel (%p278) target = $region20
        $region19: #{tpu_custom_call.1} parent=11 // pred_region
          _
        $region20: #{tpu_custom_call.1} parent=11 // pred_fallthru
          _
        // Predicated region
        $region21: #{tpu_custom_call.1} parent=11 // pred_check
          %p281 = pneg %p108
        $region22: #{tpu_custom_call.1} parent=11 // pred_check_branch
          %283 = sbr.rel (%p281) target = $region24
        $region23: #{tpu_custom_call.1} parent=11 // pred_region
          _
        $region24: #{tpu_custom_call.1} parent=11 // pred_fallthru
          _
        // Predicated region
        $region25: #{tpu_custom_call.1} parent=11 // pred_check
          %p284 = pneg %p129
        $region26: #{tpu_custom_call.1} parent=11 // pred_check_branch
          %286 = sbr.rel (%p284) target = $region28
        $region27: #{tpu_custom_call.1} parent=11 // pred_region
          _
        $region28: #{tpu_custom_call.1} parent=11 // pred_fallthru
          _
        // Predicated region
        $region29: #{tpu_custom_call.1} parent=11 // pred_check
          %p287 = pneg %p150
        $region30: #{tpu_custom_call.1} parent=11 // pred_check_branch
          %289 = sbr.rel (%p287) target = $region32
        $region31: #{tpu_custom_call.1} parent=11 // pred_region
          _
        $region32: #{tpu_custom_call.1} parent=11 // pred_fallthru
          _
        // Predicated region
        $region33: #{tpu_custom_call.1} parent=11 // pred_check
          %p290 = pneg %p171
        $region34: #{tpu_custom_call.1} parent=11 // pred_check_branch
          %292 = sbr.rel (%p290) target = $region36
        $region35: #{tpu_custom_call.1} parent=11 // pred_region
          _
        $region36: #{tpu_custom_call.1} parent=11 // pred_fallthru
          _
        // Predicated region
        $region37: #{tpu_custom_call.1} parent=11 // pred_check
          %p293 = pneg %p192
        $region38: #{tpu_custom_call.1} parent=11 // pred_check_branch
          %295 = sbr.rel (%p293) target = $region40
        $region39: #{tpu_custom_call.1} parent=11 // pred_region
          _
        $region40: #{tpu_custom_call.1} parent=11 // pred_fallthru
          _
        // Predicated region
        $region41: #{tpu_custom_call.1} parent=11 // pred_check
          %p296 = pneg %p213
        $region42: #{tpu_custom_call.1} parent=11 // pred_check_branch
          %298 = sbr.rel (%p296) target = $region44
        $region43: #{tpu_custom_call.1} parent=11 // pred_region
          _
        $region44: #{tpu_custom_call.1} parent=11 // pred_fallthru
          _
        // Predicated region
        $region45: #{tpu_custom_call.1} parent=11 // pred_check
          %p299 = pneg %p234
        $region46: #{tpu_custom_call.1} parent=11 // pred_check_branch
          %301 = sbr.rel (%p299) target = $region48
        $region47: #{tpu_custom_call.1} parent=11 // pred_region
          _
        $region48: #{tpu_custom_call.1} parent=11 // pred_fallthru
          _
      $region12: #{tpu_custom_call.1} parent=5 // pred_fallthru
        _
      %p302 = scmp.lt.s32.totalorder %s19, 2
      // Predicated region
      $region49: #{tpu_custom_call.1} parent=5 // pred_check
        %p303 = pneg %p302
      $region50: #{tpu_custom_call.1} parent=5 // pred_check_branch
        %305 = sbr.rel (%p303) target = $region52
      $region51: #{tpu_custom_call.1} parent=5 // pred_region
        // Predicated region
        $region53: #{tpu_custom_call.1} parent=51 // pred_check
          %p306 = pneg %p39
        $region54: #{tpu_custom_call.1} parent=51 // pred_check_branch
          %308 = sbr.rel (%p306) target = $region56
        $region55: #{tpu_custom_call.1} parent=51 // pred_region
          %p309 = scmp.lt.s32.totalorder %s19, 1
          %s310 = scalar_select %p309, %s19, 1
          %s311 = smul.addr %s310, 2
          %s312 = smul.addr %s311, 4
          %s313 = scalar_lea.vmem %s0, %s312
        $region56: #{tpu_custom_call.1} parent=51 // pred_fallthru
          _
      $region52: #{tpu_custom_call.1} parent=5 // pred_fallthru
        _
      %p314 = scmp.le.s32.totalorder 1, %s19
      %p315 = scmp.lt.s32.totalorder %s19, 3
      %p316 = pnand %p314, %p315
      %p317 = pneg %p316
      // Predicated region
      $region57: #{tpu_custom_call.1} parent=5 // pred_check
        _
      $region58: #{tpu_custom_call.1} parent=5 // pred_check_branch
        %319 = sbr.rel (%p316) target = $region60
      $region59: #{tpu_custom_call.1} parent=5 // pred_region
        %s320 = ssub.s32 %s19, 1
        %p321 = scmp.lt.s32.totalorder %s24, 1
        %s322 = scalar_select %p321, %s24, 1
        %s323 = smul.addr %s322, 2
        %s324 = smul.addr %s323, 4
        %s325 = scalar_lea.vmem %s0, %s324
        %p326 = pneg %p45
        %p327 = pneg %p42
        %p328 = pneg %p66
        %p329 = pneg %p63
        %p330 = pneg %p87
        %p331 = pneg %p84
        %p332 = pneg %p108
        %p333 = pneg %p105
        %p334 = pneg %p129
        %p335 = pneg %p126
        %p336 = pneg %p150
        %p337 = pneg %p147
        %p338 = pneg %p171
        %p339 = pneg %p168
        %p340 = pneg %p192
        %p341 = pneg %p189
        %p342 = pneg %p213
        %p343 = pneg %p210
        %p344 = pneg %p234
        %p345 = pneg %p231
        %p346 = pneg %p260
        %p347 = pneg %p257
        %s348 = sand.u32 %s247, 1
        %s349 = scalar_lea.sflag [#allocation3], %s348
        %s350 = sand.u32 %s247, 1
        %s351 = smul.addr %s350, 8
        %s352 = scalar_lea.vmem [#allocation2], %s351
        %p353 = scmp.lt.s32.totalorder %s24, 1
        %s354 = scalar_select %p353, %s24, 1
        %s355 = smul.addr %s354, 2
        %s356 = smul.addr %s355, 4
        %s357 = scalar_lea.vmem %s0, %s356
        %v359 = vld [vmem:[%s357] sm:$0xff]
        %v360 = vld [vmem:[%s5] sm:$0x3]
        %v361 = vld [vmem:[%s6] sm:$0x3]
        %v362 = vmax.f32 %v359, 0.0
        %v364 = vcombine.high %v362, %v362
        %365 = vrot.lane.b32.xlu0 %v364, 17
        %v366 = vpop.permute.xlu0 %365
        %368 = vrot.lane.b32.xlu0 %v362, 17
        %v369 = vpop.permute.xlu0 %368
        %vm370 = vcmask 138240
        %v371 = vsel %vm370, %v369, %v366
        %v374 = vsel %vm370, %v366, %v369
        %vm375 = vcmp.ge.s32.totalorder %v360, 1
        %vm376 = vcmp.ge.s32.totalorder %v361, 1
        %vm377 = vmand %vm375, %vm376
        %v378 = vsel %vm377, 1, 0
        %v379 = vlaneseq
        %v380 = vshrl.u32 %v379, 7
        %v381 = vsub.s32 0, %v380
        %v382 = vrot.slane %v378, %v381
        %v383 = vlaneseq
        %v384 = vshrl.u32 %v383, 7
        %v385 = vsub.s32 1, %v384
        %v386 = vrot.slane %v378, %v385
        %vm387 = vcmp.eq.s32.totalorder %v382, 1
        %vm388 = vcmp.eq.s32.totalorder %v386, 1
        %v389 = vsel %vm387, %v374, 0.0
        %v390 = vsel %vm388, %v371, 0.0
        %391 = vrot.lane.b32.xlu0 %v364, 16
        %v392 = vpop.permute.xlu0 %391
        %394 = vrot.lane.b32.xlu0 %v362, 16
        %v395 = vpop.permute.xlu0 %394
        %vm396 = vcmask 130048
        %v397 = vsel %vm396, %v395, %v392
        %v400 = vsel %vm396, %v392, %v395
        %v401 = vsel %vm375, 1, 0
        %v402 = vlaneseq
        %v403 = vshrl.u32 %v402, 7
        %v404 = vsub.s32 0, %v403
        %v405 = vrot.slane %v401, %v404
        %v406 = vlaneseq
        %v407 = vshrl.u32 %v406, 7
        %v408 = vsub.s32 1, %v407
        %v409 = vrot.slane %v401, %v408
        %vm410 = vcmp.eq.s32.totalorder %v405, 1
        %vm411 = vcmp.eq.s32.totalorder %v409, 1
        %v412 = vsel %vm410, %v400, 0.0
        %v413 = vsel %vm411, %v397, 0.0
        %414 = vrot.lane.b32.xlu0 %v364, 15
        %v415 = vpop.permute.xlu0 %414
        %417 = vrot.lane.b32.xlu0 %v362, 15
        %v418 = vpop.permute.xlu0 %417
        %vm419 = vcmask 121856
        %v420 = vsel %vm419, %v418, %v415
        %v423 = vsel %vm419, %v415, %v418
        %vm424 = vcmp.le.s32.totalorder %v361, 14
        %vm425 = vmand %vm375, %vm424
        %v426 = vsel %vm425, 1, 0
        %v427 = vlaneseq
        %v428 = vshrl.u32 %v427, 7
        %v429 = vsub.s32 0, %v428
        %v430 = vrot.slane %v426, %v429
        %v431 = vlaneseq
        %v432 = vshrl.u32 %v431, 7
        %v433 = vsub.s32 1, %v432
        %v434 = vrot.slane %v426, %v433
        %vm435 = vcmp.eq.s32.totalorder %v430, 1
        %vm436 = vcmp.eq.s32.totalorder %v434, 1
        %v437 = vsel %vm435, %v423, 0.0
        %v438 = vsel %vm436, %v420, 0.0
        %439 = vrot.lane.b32.xlu0 %v364, 1
        %v440 = vpop.permute.xlu0 %439
        %442 = vrot.lane.b32.xlu0 %v362, 1
        %v443 = vpop.permute.xlu0 %442
        %vm444 = vcmask 7168
        %v445 = vsel %vm444, %v443, %v440
        %v448 = vsel %vm444, %v440, %v443
        %v449 = vsel %vm376, 1, 0
        %v450 = vlaneseq
        %v451 = vshrl.u32 %v450, 7
        %v452 = vsub.s32 0, %v451
        %v453 = vrot.slane %v449, %v452
        %v454 = vlaneseq
        %v455 = vshrl.u32 %v454, 7
        %v456 = vsub.s32 1, %v455
        %v457 = vrot.slane %v449, %v456
        %vm458 = vcmp.eq.s32.totalorder %v453, 1
        %vm459 = vcmp.eq.s32.totalorder %v457, 1
        %v460 = vsel %vm458, %v448, 0.0
        %v461 = vsel %vm459, %v445, 0.0
        %462 = vrot.lane.b32.xlu0 %v362, 127
        %v463 = vpop.permute.xlu0 %462
        %464 = vrot.lane.b32.xlu0 %v364, 127
        %v465 = vpop.permute.xlu0 %464
        %vm466 = vcmask 1039360
        %v467 = vsel %vm466, %v463, %v465
        %v471 = vsel %vm466, %v465, %v463
        %v472 = vsel %vm424, 1, 0
        %v473 = vlaneseq
        %v474 = vshrl.u32 %v473, 7
        %v475 = vsub.s32 0, %v474
        %v476 = vrot.slane %v472, %v475
        %v477 = vlaneseq
        %v478 = vshrl.u32 %v477, 7
        %v479 = vsub.s32 1, %v478
        %v480 = vrot.slane %v472, %v479
        %vm481 = vcmp.eq.s32.totalorder %v476, 1
        %vm482 = vcmp.eq.s32.totalorder %v480, 1
        %v483 = vsel %vm481, %v467, 0.0
        %v484 = vsel %vm482, %v471, 0.0
        %485 = vrot.lane.b32.xlu0 %v362, 113
        %v486 = vpop.permute.xlu0 %485
        %487 = vrot.lane.b32.xlu0 %v364, 113
        %v488 = vpop.permute.xlu0 %487
        %vm489 = vcmask 924672
        %v490 = vsel %vm489, %v486, %v488
        %v494 = vsel %vm489, %v488, %v486
        %vm495 = vcmp.le.s32.totalorder %v360, 14
        %vm496 = vmand %vm495, %vm376
        %v497 = vsel %vm496, 1, 0
        %v498 = vlaneseq
        %v499 = vshrl.u32 %v498, 7
        %v500 = vsub.s32 0, %v499
        %v501 = vrot.slane %v497, %v500
        %v502 = vlaneseq
        %v503 = vshrl.u32 %v502, 7
        %v504 = vsub.s32 1, %v503
        %v505 = vrot.slane %v497, %v504
        %vm506 = vcmp.eq.s32.totalorder %v501, 1
        %vm507 = vcmp.eq.s32.totalorder %v505, 1
        %v508 = vsel %vm506, %v490, 0.0
        %v509 = vsel %vm507, %v494, 0.0
        %510 = vrot.lane.b32.xlu0 %v362, 112
        %v511 = vpop.permute.xlu0 %510
        %512 = vrot.lane.b32.xlu0 %v364, 112
        %v513 = vpop.permute.xlu0 %512
        %vm514 = vcmask 916480
        %v515 = vsel %vm514, %v511, %v513
        %v519 = vsel %vm514, %v513, %v511
        %v520 = vsel %vm495, 1, 0
        %v521 = vlaneseq
        %v522 = vshrl.u32 %v521, 7
        %v523 = vsub.s32 0, %v522
        %v524 = vrot.slane %v520, %v523
        %v525 = vlaneseq
        %v526 = vshrl.u32 %v525, 7
        %v527 = vsub.s32 1, %v526
        %v528 = vrot.slane %v520, %v527
        %vm529 = vcmp.eq.s32.totalorder %v524, 1
        %vm530 = vcmp.eq.s32.totalorder %v528, 1
        %v531 = vsel %vm529, %v515, 0.0
        %v532 = vsel %vm530, %v519, 0.0
        %533 = vrot.lane.b32.xlu0 %v362, 111
        %v534 = vpop.permute.xlu0 %533
        %535 = vrot.lane.b32.xlu0 %v364, 111
        %v536 = vpop.permute.xlu0 %535
        %vm537 = vcmask 908288
        %v538 = vsel %vm537, %v534, %v536
        %v542 = vsel %vm537, %v536, %v534
        %vm543 = vmand %vm495, %vm424
        %v544 = vsel %vm543, 1, 0
        %v545 = vlaneseq
        %v546 = vshrl.u32 %v545, 7
        %v547 = vsub.s32 0, %v546
        %v548 = vrot.slane %v544, %v547
        %v549 = vlaneseq
        %v550 = vshrl.u32 %v549, 7
        %v551 = vsub.s32 1, %v550
        %v552 = vrot.slane %v544, %v551
        %vm553 = vcmp.eq.s32.totalorder %v548, 1
        %vm554 = vcmp.eq.s32.totalorder %v552, 1
        %v555 = vsel %vm553, %v538, 0.0
        %v556 = vsel %vm554, %v542, 0.0
        %v559 = vrot.slane %v412, 4
        %v560 = vrot.slane %v413, 4
        %v565 = vrot.slane %v460, 4
        %v566 = vrot.slane %v461, 4
        %v572 = vrot.slane %v483, 4
        %v573 = vrot.slane %v484, 4
        %v578 = vrot.slane %v531, 4
        %v579 = vrot.slane %v532, 4
        %vm582 = vcmask 1043456
        %v583 = vsel %vm582, %v389, %v559
        %v584 = vsel %vm582, %v390, %v560
        %v585 = vsel %vm582, %v437, %v565
        %v586 = vsel %vm582, %v438, %v566
        %v587 = vsel %vm582, %v362, %v572
        %v588 = vsel %vm582, %v364, %v573
        %v589 = vsel %vm582, %v508, %v578
        %v590 = vsel %vm582, %v509, %v579
        %v591 = vld [vmem:[%s1] sm:$0x3]
        %v592 = vpack.c.bf16 %v585, %v583
        %v593 = vpack.c.bf16 %v586, %v584
        %v594 = vpack.c.bf16 %v589, %v587
        %v595 = vpack.c.bf16 %v590, %v588
        %v596 = vpack.c.bf16 %v555, %v555
        %v597 = vpack.c.bf16 %v556, %v556
        %v598 = vld [vmem:[%s2] sm:$0xf]
        %600 = vset.pattern.permute.xlu0 0
        %601 = vperm.xlu0 %600, %v598
        %v602 = vpop.permute.xlu0 %601
        %vm604 = vcmask 293888
        %v606 = vsel %vm604, %v591, 0
        %vm608 = vcmask 1041408
        %v610 = vsel %vm608, %v596, 0
        %v613 = vsel %vm608, %v597, 0
        %615 = vmatprep.subr.bf16.mxu0 %v593
        %616 = vmatpush1.bf16.msra.mxu0 %v592
        %617 = vmatprep.subr.bf16.mxu0 %v595
        %618 = vmatpush1.bf16.msra.mxu0 %v594
        %619 = vmatprep.subr.bf16.mxu0 %v613
        %620 = vmatpush1.bf16.msra.mxu0 %v610
        %621 = vmatprep.subr.bf16.mxu0 0
        %622 = vmatpush1.bf16.msra.mxu0 0
        %623 = vmatprep.subr.bf16.mxu0 0
        %624 = vmatpush1.bf16.msra.mxu0 0
        %625 = vmatprep.subr.bf16.mxu0 0
        %626 = vmatpush1.bf16.msra.mxu0 0
        %627 = vmatprep.subr.bf16.mxu0 0
        %628 = vmatpush1.bf16.msra.mxu0 0
        %629 = vmatprep.subr.bf16.mxu0 0
        %630 = vmatpush1.bf16.msra.mxu0 0
        %631 = vmatprep.subr.bf16.mxu0 0
        %632 = vmatpush1.bf16.msra.mxu0 0
        %633 = vmatprep.subr.bf16.mxu0 0
        %634 = vmatpush1.bf16.msra.mxu0 0
        %635 = vmatprep.subr.bf16.mxu0 0
        %636 = vmatpush1.bf16.msra.mxu0 0
        %637 = vmatprep.subr.bf16.mxu0 0
        %638 = vmatpush1.bf16.msra.mxu0 0
        %639 = vmatprep.subr.bf16.mxu0 0
        %640 = vmatpush1.bf16.msra.mxu0 0
        %641 = vmatprep.subr.bf16.mxu0 0
        %642 = vmatpush1.bf16.msra.mxu0 0
        %643 = vmatprep.subr.bf16.mxu0 0
        %644 = vmatpush1.bf16.msra.mxu0 0
        %645 = vmatprep.subr.bf16.mxu0 0
        %646 = vmatpush1.bf16.msra.mxu0 0
        %647 = vmatprep.mubr.bf16.mxu0 0
        %648 = vmatmul.mubr.bf16.gmra.mrb[0].mxu0 %v606
        %v649 = vpop.f32.mrb[0].mxu0
        %v650 = vadd.f32 %v602, %v649
        %v651 = vpop.f32.mrb[0].mxu0
        %v652 = vadd.f32 %v602, %v651
        %v653 = vpop.f32.mrb[0].mxu0
        %v654 = vpop.f32.mrb[0].mxu0
        %655 = vdwg.mxu0
        %v656 = vmax.f32 %v650, 0.0
        %v657 = vmax.f32 %v652, 0.0
        %659 = vrot.lane.b32.xlu0 %v657, 17
        %v660 = vpop.permute.xlu0 %659
        %663 = vrot.lane.b32.xlu0 %v656, 17
        %v664 = vpop.permute.xlu0 %663
        %v665 = vsel %vm370, %v664, %v660
        %v668 = vsel %vm370, %v660, %v664
        %v669 = vsel %vm387, %v668, 0.0
        %v670 = vsel %vm388, %v665, 0.0
        %671 = vrot.lane.b32.xlu0 %v657, 16
        %v672 = vpop.permute.xlu0 %671
        %674 = vrot.lane.b32.xlu0 %v656, 16
        %v675 = vpop.permute.xlu0 %674
        %v676 = vsel %vm396, %v675, %v672
        %v679 = vsel %vm396, %v672, %v675
        %v680 = vsel %vm410, %v679, 0.0
        %v681 = vsel %vm411, %v676, 0.0
        %682 = vrot.lane.b32.xlu0 %v657, 15
        %v683 = vpop.permute.xlu0 %682
        %685 = vrot.lane.b32.xlu0 %v656, 15
        %v686 = vpop.permute.xlu0 %685
        %v687 = vsel %vm419, %v686, %v683
        %v690 = vsel %vm419, %v683, %v686
        %v691 = vsel %vm435, %v690, 0.0
        %v692 = vsel %vm436, %v687, 0.0
        %693 = vrot.lane.b32.xlu0 %v657, 1
        %v694 = vpop.permute.xlu0 %693
        %696 = vrot.lane.b32.xlu0 %v656, 1
        %v697 = vpop.permute.xlu0 %696
        %v698 = vsel %vm444, %v697, %v694
        %v701 = vsel %vm444, %v694, %v697
        %v702 = vsel %vm458, %v701, 0.0
        %v703 = vsel %vm459, %v698, 0.0
        %704 = vrot.lane.b32.xlu0 %v656, 127
        %v705 = vpop.permute.xlu0 %704
        %706 = vrot.lane.b32.xlu0 %v657, 127
        %v707 = vpop.permute.xlu0 %706
        %v708 = vsel %vm466, %v705, %v707
        %v712 = vsel %vm466, %v707, %v705
        %v713 = vsel %vm481, %v708, 0.0
        %v714 = vsel %vm482, %v712, 0.0
        %715 = vrot.lane.b32.xlu0 %v656, 113
        %v716 = vpop.permute.xlu0 %715
        %717 = vrot.lane.b32.xlu0 %v657, 113
        %v718 = vpop.permute.xlu0 %717
        %v719 = vsel %vm489, %v716, %v718
        %v723 = vsel %vm489, %v718, %v716
        %v724 = vsel %vm506, %v719, 0.0
        %v725 = vsel %vm507, %v723, 0.0
        %726 = vrot.lane.b32.xlu0 %v656, 112
        %v727 = vpop.permute.xlu0 %726
        %728 = vrot.lane.b32.xlu0 %v657, 112
        %v729 = vpop.permute.xlu0 %728
        %v730 = vsel %vm514, %v727, %v729
        %v734 = vsel %vm514, %v729, %v727
        %v735 = vsel %vm529, %v730, 0.0
        %v736 = vsel %vm530, %v734, 0.0
        %737 = vrot.lane.b32.xlu0 %v656, 111
        %v738 = vpop.permute.xlu0 %737
        %739 = vrot.lane.b32.xlu0 %v657, 111
        %v740 = vpop.permute.xlu0 %739
        %v741 = vsel %vm537, %v738, %v740
        %v745 = vsel %vm537, %v740, %v738
        %v746 = vsel %vm553, %v741, 0.0
        %v747 = vsel %vm554, %v745, 0.0
        %v750 = vrot.slane %v680, 4
        %v751 = vrot.slane %v681, 4
        %v756 = vrot.slane %v702, 4
        %v757 = vrot.slane %v703, 4
        %v762 = vrot.slane %v713, 4
        %v763 = vrot.slane %v714, 4
        %v768 = vrot.slane %v735, 4
        %v769 = vrot.slane %v736, 4
        %v772 = vsel %vm582, %v669, %v750
        %v773 = vsel %vm582, %v670, %v751
        %v774 = vsel %vm582, %v691, %v756
        %v775 = vsel %vm582, %v692, %v757
        %v776 = vsel %vm582, %v656, %v762
        %v777 = vsel %vm582, %v657, %v763
        %v778 = vsel %vm582, %v724, %v768
        %v779 = vsel %vm582, %v725, %v769
        %v780 = vld [vmem:[%s3] sm:$0xf]
        %v781 = vpack.c.bf16 %v774, %v772
        %v782 = vpack.c.bf16 %v775, %v773
        %v783 = vpack.c.bf16 %v778, %v776
        %v784 = vpack.c.bf16 %v779, %v777
        %v785 = vpack.c.bf16 %v746, %v746
        %v786 = vpack.c.bf16 %v747, %v747
        %v787 = vld [vmem:[%s4] sm:$0xff]
        %789 = vset.pattern.permute.xlu0 0
        %790 = vperm.xlu0 %789, %v787
        %v791 = vpop.permute.xlu0 %790
        %v794 = vsel %vm604, %v780, 0
        %v797 = vsel %vm608, %v785, 0
        %v800 = vsel %vm608, %v786, 0
        %802 = vmatprep.subr.bf16.mxu0 %v782
        %803 = vmatpush1.bf16.msra.mxu0 %v781
        %804 = vmatprep.subr.bf16.mxu0 %v784
        %805 = vmatpush1.bf16.msra.mxu0 %v783
        %806 = vmatprep.subr.bf16.mxu0 %v800
        %807 = vmatpush1.bf16.msra.mxu0 %v797
        %808 = vmatprep.subr.bf16.mxu0 0
        %809 = vmatpush1.bf16.msra.mxu0 0
        %810 = vmatprep.subr.bf16.mxu0 0
        %811 = vmatpush1.bf16.msra.mxu0 0
        %812 = vmatprep.subr.bf16.mxu0 0
        %813 = vmatpush1.bf16.msra.mxu0 0
        %814 = vmatprep.subr.bf16.mxu0 0
        %815 = vmatpush1.bf16.msra.mxu0 0
        %816 = vmatprep.subr.bf16.mxu0 0
        %817 = vmatpush1.bf16.msra.mxu0 0
        %818 = vmatprep.subr.bf16.mxu0 0
        %819 = vmatpush1.bf16.msra.mxu0 0
        %820 = vmatprep.subr.bf16.mxu0 0
        %821 = vmatpush1.bf16.msra.mxu0 0
        %822 = vmatprep.subr.bf16.mxu0 0
        %823 = vmatpush1.bf16.msra.mxu0 0
        %824 = vmatprep.subr.bf16.mxu0 0
        %825 = vmatpush1.bf16.msra.mxu0 0
        %826 = vmatprep.subr.bf16.mxu0 0
        %827 = vmatpush1.bf16.msra.mxu0 0
        %828 = vmatprep.subr.bf16.mxu0 0
        %829 = vmatpush1.bf16.msra.mxu0 0
        %830 = vmatprep.subr.bf16.mxu0 0
        %831 = vmatpush1.bf16.msra.mxu0 0
        %832 = vmatprep.subr.bf16.mxu0 0
        %833 = vmatpush1.bf16.msra.mxu0 0
        %834 = vmatprep.mubr.bf16.mxu0 0
        %835 = vmatmul.mubr.bf16.gmra.mrb[0].mxu0 %v794
        %v836 = vpop.f32.mrb[0].mxu0
        %v837 = vadd.f32 %v791, %v836
        %v838 = vpop.f32.mrb[0].mxu0
        %v839 = vadd.f32 %v791, %v838
        %v840 = vpop.f32.mrb[0].mxu0
        %v841 = vpop.f32.mrb[0].mxu0
        %842 = vdwg.mxu0
        %v843 = vld [vmem:[%s7] sm:$0xf]
        %v845 = vcombine.high %v359, %v359
        %v847 = vpack.c.bf16 %v359, %v359
        %v848 = vpack.c.bf16 %v845, %v845
        %v849 = vld [vmem:[%s8] sm:$0xff]
        %851 = vset.pattern.permute.xlu0 0
        %852 = vperm.xlu0 %851, %v849
        %v853 = vpop.permute.xlu0 %852
        %vm855 = vcmask 31744
        %v857 = vsel %vm855, %v843, 0
        %v860 = vsel %vm608, %v847, 0
        %v863 = vsel %vm608, %v848, 0
        %865 = vmatprep.subr.bf16.mxu0 %v863
        %866 = vmatpush1.bf16.msra.mxu0 %v860
        %867 = vmatprep.subr.bf16.mxu0 0
        %868 = vmatpush1.bf16.msra.mxu0 0
        %869 = vmatprep.subr.bf16.mxu0 0
        %870 = vmatpush1.bf16.msra.mxu0 0
        %871 = vmatprep.subr.bf16.mxu0 0
        %872 = vmatpush1.bf16.msra.mxu0 0
        %873 = vmatprep.subr.bf16.mxu0 0
        %874 = vmatpush1.bf16.msra.mxu0 0
        %875 = vmatprep.subr.bf16.mxu0 0
        %876 = vmatpush1.bf16.msra.mxu0 0
        %877 = vmatprep.subr.bf16.mxu0 0
        %878 = vmatpush1.bf16.msra.mxu0 0
        %879 = vmatprep.subr.bf16.mxu0 0
        %880 = vmatpush1.bf16.msra.mxu0 0
        %881 = vmatprep.subr.bf16.mxu0 0
        %882 = vmatpush1.bf16.msra.mxu0 0
        %883 = vmatprep.subr.bf16.mxu0 0
        %884 = vmatpush1.bf16.msra.mxu0 0
        %885 = vmatprep.subr.bf16.mxu0 0
        %886 = vmatpush1.bf16.msra.mxu0 0
        %887 = vmatprep.subr.bf16.mxu0 0
        %888 = vmatpush1.bf16.msra.mxu0 0
        %889 = vmatprep.subr.bf16.mxu0 0
        %890 = vmatpush1.bf16.msra.mxu0 0
        %891 = vmatprep.subr.bf16.mxu0 0
        %892 = vmatpush1.bf16.msra.mxu0 0
        %893 = vmatprep.subr.bf16.mxu0 0
        %894 = vmatpush1.bf16.msra.mxu0 0
        %895 = vmatprep.subr.bf16.mxu0 0
        %896 = vmatpush1.bf16.msra.mxu0 0
        %897 = vmatprep.mubr.bf16.mxu0 0
        %898 = vmatmul.mubr.bf16.gmra.mrb[0].mxu0 %v857
        %v899 = vpop.f32.mrb[0].mxu0
        %v900 = vadd.f32 %v853, %v899
        %v901 = vpop.f32.mrb[0].mxu0
        %v902 = vadd.f32 %v853, %v901
        %v903 = vpop.f32.mrb[0].mxu0
        %v904 = vpop.f32.mrb[0].mxu0
        %905 = vdwg.mxu0
        %v906 = vadd.f32 %v837, %v900
        %v907 = vadd.f32 %v839, %v902
        %v908 = vld [vmem:[%s9] sm:$0xff]
        %v909 = vld [vmem:[%s9 + $0x8] sm:$0xff]
        %v910 = vld [vmem:[%s9 + $0x10] sm:$0xff]
        %v911 = vld [vmem:[%s9 + $0x18] sm:$0xff]
        %v912 = vld [vmem:[%s9 + $0x20] sm:$0xff]
        %v913 = vld [vmem:[%s9 + $0x28] sm:$0xff]
        %v914 = vld [vmem:[%s9 + $0x30] sm:$0xff]
        %v915 = vld [vmem:[%s9 + $0x38] sm:$0xff]
        %v916 = vld [vmem:[%s9 + $0x40] sm:$0xff]
        %v917 = vld [vmem:[%s9 + $0x48] sm:$0xff]
        %v918 = vld [vmem:[%s9 + $0x50] sm:$0xff]
        %v919 = vld [vmem:[%s9 + $0x58] sm:$0xff]
        %v920 = vld [vmem:[%s9 + $0x60] sm:$0xff]
        %v921 = vld [vmem:[%s9 + $0x68] sm:$0xff]
        %v922 = vld [vmem:[%s9 + $0x70] sm:$0xff]
        %v923 = vld [vmem:[%s9 + $0x78] sm:$0xff]
        %v924 = vld [vmem:[%s9 + $0x80] sm:$0xff]
        %v925 = vld [vmem:[%s9 + $0x88] sm:$0xff]
        %v926 = vld [vmem:[%s9 + $0x90] sm:$0xff]
        %v927 = vld [vmem:[%s9 + $0x98] sm:$0xff]
        %v928 = vld [vmem:[%s9 + $0xa0] sm:$0xff]
        %v929 = vld [vmem:[%s9 + $0xa8] sm:$0xff]
        %v930 = vld [vmem:[%s9 + $0xb0] sm:$0xff]
        %v931 = vld [vmem:[%s9 + $0xb8] sm:$0xff]
        %v932 = vld [vmem:[%s9 + $0xc0] sm:$0xff]
        %v933 = vld [vmem:[%s9 + $0xc8] sm:$0xff]
        %v934 = vld [vmem:[%s9 + $0xd0] sm:$0xff]
        %v935 = vld [vmem:[%s9 + $0xd8] sm:$0xff]
        %v936 = vld [vmem:[%s9 + $0xe0] sm:$0xff]
        %v937 = vld [vmem:[%s9 + $0xe8] sm:$0xff]
        %v938 = vld [vmem:[%s9 + $0xf0] sm:$0xff]
        %v939 = vld [vmem:[%s9 + $0xf8] sm:$0xff]
        %940 = vmatprep.subr.mxu0 0.0
        %941 = vmatpush1.msra.mxu0 %v908
        %942 = vmatprep.subr.mxu0 0.0
        %943 = vmatpush1.msra.mxu0 %v909
        %944 = vmatprep.subr.mxu0 0.0
        %945 = vmatpush1.msra.mxu0 %v910
        %946 = vmatprep.subr.mxu0 0.0
        %947 = vmatpush1.msra.mxu0 %v911
        %948 = vmatprep.subr.mxu0 0.0
        %949 = vmatpush1.msra.mxu0 %v912
        %950 = vmatprep.subr.mxu0 0.0
        %951 = vmatpush1.msra.mxu0 %v913
        %952 = vmatprep.subr.mxu0 0.0
        %953 = vmatpush1.msra.mxu0 %v914
        %954 = vmatprep.subr.mxu0 0.0
        %955 = vmatpush1.msra.mxu0 %v915
        %956 = vmatprep.subr.mxu0 0.0
        %957 = vmatpush1.msra.mxu0 %v916
        %958 = vmatprep.subr.mxu0 0.0
        %959 = vmatpush1.msra.mxu0 %v917
        %960 = vmatprep.subr.mxu0 0.0
        %961 = vmatpush1.msra.mxu0 %v918
        %962 = vmatprep.subr.mxu0 0.0
        %963 = vmatpush1.msra.mxu0 %v919
        %964 = vmatprep.subr.mxu0 0.0
        %965 = vmatpush1.msra.mxu0 %v920
        %966 = vmatprep.subr.mxu0 0.0
        %967 = vmatpush1.msra.mxu0 %v921
        %968 = vmatprep.subr.mxu0 0.0
        %969 = vmatpush1.msra.mxu0 %v922
        %970 = vmatprep.subr.mxu0 0.0
        %971 = vmatpush1.msra.mxu0 %v923
        %972 = vmatprep.subr.mxu0 0.0
        %973 = vmatpush1.msra.mxu0 %v924
        %974 = vmatprep.subr.mxu0 0.0
        %975 = vmatpush1.msra.mxu0 %v925
        %976 = vmatprep.subr.mxu0 0.0
        %977 = vmatpush1.msra.mxu0 %v926
        %978 = vmatprep.subr.mxu0 0.0
        %979 = vmatpush1.msra.mxu0 %v927
        %980 = vmatprep.subr.mxu0 0.0
        %981 = vmatpush1.msra.mxu0 %v928
        %982 = vmatprep.subr.mxu0 0.0
        %983 = vmatpush1.msra.mxu0 %v929
        %984 = vmatprep.subr.mxu0 0.0
        %985 = vmatpush1.msra.mxu0 %v930
        %986 = vmatprep.subr.mxu0 0.0
        %987 = vmatpush1.msra.mxu0 %v931
        %988 = vmatprep.subr.mxu0 0.0
        %989 = vmatpush1.msra.mxu0 %v932
        %990 = vmatprep.subr.mxu0 0.0
        %991 = vmatpush1.msra.mxu0 %v933
        %992 = vmatprep.subr.mxu0 0.0
        %993 = vmatpush1.msra.mxu0 %v934
        %994 = vmatprep.subr.mxu0 0.0
        %995 = vmatpush1.msra.mxu0 %v935
        %996 = vmatprep.subr.mxu0 0.0
        %997 = vmatpush1.msra.mxu0 %v936
        %998 = vmatprep.subr.mxu0 0.0
        %999 = vmatpush1.msra.mxu0 %v937
        %1000 = vmatprep.subr.mxu0 0.0
        %1001 = vmatpush1.msra.mxu0 %v938
        %1002 = vmatprep.subr.mxu0 0.0
        %1003 = vmatpush1.msra.mxu0 %v939
        %1004 = vmatprep.mubr.f32.mxu0 %v907
        %1005 = vmatmul.mubr.f32.gmra.mrb[0].mxu0 %v906
        %v1006 = vpop.f32.mrb[0].mxu0
        %v1007 = vadd.f32 0.0, %v1006
        %v1008 = vpop.f32.mrb[0].mxu0
        %1009 = vdwg.mxu0
        %vm1010 = vcmask 523264
        %1011 = vst.msk [vmem:[%s352] sm:$0xff] %vm1010, %v1007
        %s1012 = sand.u32 %s247, 1
        %s1013 = scalar_lea.sflag [#allocation3], %s1012
        %s1014 = sand.u32 %s247, 1
        %s1015 = smul.addr %s1014, 8
        %s1016 = scalar_lea.vmem [#allocation2], %s1015
        // Predicated region
        $region61: #{tpu_custom_call.1} parent=59 // pred_check
          %p1017 = pneg %p257
        $region62: #{tpu_custom_call.1} parent=59 // pred_check_branch
          %1019 = sbr.rel (%p1017) target = $region64
        $region63: #{tpu_custom_call.1} parent=59 // pred_region
          %s1021 = ssub.s32 128, 128
          %1022 = vsyncadd %s1013, %s1021
          %s1023 = smul.addr %s24, 128
          %s1024 = scalar_lea.hbm %s10, %s1023
          %s1026 = sshll.u32 %s1016, 4
          %s1027 = int_to_ptr.vmem [resolvable:$true] %s1026
          %1029 = dma.vmem_to_hbm [thread:$0]  %s1027, 128, %s1024, %s1013
        $region64: #{tpu_custom_call.1} parent=59 // pred_fallthru
          _
      $region60: #{tpu_custom_call.1} parent=5 // pred_fallthru
        _
      %p1030 = scmp.le.s32.totalorder 2, %s19
      // Predicated region
      $region65: #{tpu_custom_call.1} parent=5 // pred_check
        %p1031 = pneg %p1030
      $region66: #{tpu_custom_call.1} parent=5 // pred_check_branch
        %1033 = sbr.rel (%p1031) target = $region68
      $region67: #{tpu_custom_call.1} parent=5 // pred_region
        %s1034 = ssub.s32 %s19, 2
        // Predicated region
        $region69: #{tpu_custom_call.1} parent=67 // pred_check
          %p1035 = pneg %p263
        $region70: #{tpu_custom_call.1} parent=67 // pred_check_branch
          %1037 = sbr.rel (%p1035) target = $region72
        $region71: #{tpu_custom_call.1} parent=67 // pred_region
          %s1038 = sand.u32 %s248, 1
          %s1039 = scalar_lea.sflag [#allocation3], %s1038
          %s1040 = sand.u32 %s248, 1
          %s1041 = smul.addr %s1040, 8
          %s1042 = scalar_lea.vmem [#allocation2], %s1041
          %1043 = dma.done %s1039, 128
        $region72: #{tpu_custom_call.1} parent=67 // pred_fallthru
          _
      $region68: #{tpu_custom_call.1} parent=5 // pred_fallthru
        _
    $region6: #{tpu_custom_call.1} parent=1 // loop_footer
      %s23 = sadd.s32 1, %s19
    $region7: #{tpu_custom_call.1} parent=1 // loop_footer_branch
      %18 = sbr.rel target = $region3
    $region8: #{tpu_custom_call.1} parent=1 // loop_exit
      _
    %1044 = vsyncpa [#allocation3], 1
    %s1045 = scalar_lea.sflag [#allocation3], 1
    %1046 = vsyncpa %s1045, 1

</llo_original>
